<compile_context>
chip_gen: v6e
topology: v6e:2x2x1
jax: 0.10.0
libtpu: 0.0.40
codegen_flags: <defaults>
</compile_context>

<pallas_src>
import jax
import jax.numpy as jnp
from jax.experimental import pallas as pl
from jax.experimental.pallas import tpu as pltpu

_LANES = 128
_SUBLANES = 8


def _fma_kernel(w_ref, b_ref, x_ref, o_ref):
    # w_ref, b_ref: (1,) f32 scalars in SMEM.
    # x_ref / o_ref: (rows, 128) slabs in VMEM (f32 or bf16).
    x = x_ref[...].astype(jnp.float32)  # explicit f32 compute (v5e: no bf16 VPU)
    o_ref[...] = (x * w_ref[0] + b_ref[0]).astype(o_ref.dtype)


def simple_net_forward(x, weight, bias, *, tile_rows=4096):
    """PyTorch nn.Linear(1, 1) forward.

    x: (B, 1), weight: (1, 1), bias: (1,) -> (B, 1) in x.dtype.
    Non-f32/bf16 inputs are computed through f32 and cast back.
    """
    B, IN = x.shape
    assert IN == 1 and weight.shape == (1, 1) and bias.shape == (1,)
    OUT = 1

    # Keep bf16/f32 slabs at native width (bandwidth-bound op); else use f32.
    if x.dtype == jnp.bfloat16 or x.dtype == jnp.float32:
        slab_dtype = x.dtype
    else:
        slab_dtype = jnp.float32

    total = B
    rows = pl.cdiv(total, _LANES)
    rows = ((rows + _SUBLANES - 1) // _SUBLANES) * _SUBLANES
    padded = rows * _LANES

    x_flat = jnp.ravel(x).astype(slab_dtype)
    if padded != total:
        # Single pad: lane + sublane alignment in one op. No grid-alignment
        # pad — the last grid block is allowed to be partial.
        x_flat = jnp.pad(x_flat, (0, padded - total))
    x2d = x_flat.reshape(rows, _LANES)

    # Scalar parameters as two (1,) f32 SMEM inputs.
    w = weight.reshape(-1).astype(jnp.float32)
    b = bias.reshape(-1).astype(jnp.float32)
    smem_spec = pl.BlockSpec(memory_space=pltpu.MemorySpace.SMEM)

    if rows <= tile_rows:
        # Small case: one whole-array block, no grid, no pipelining overhead.
        y2d = pl.pallas_call(
            _fma_kernel,
            out_shape=jax.ShapeDtypeStruct((rows, _LANES), slab_dtype),
            in_specs=[
                smem_spec,
                smem_spec,
                pl.BlockSpec(memory_space=pltpu.MemorySpace.VMEM),
            ],
            out_specs=pl.BlockSpec(memory_space=pltpu.MemorySpace.VMEM),
        )(w, b, x2d)
    else:
        # Large case: stream rows through a "parallel" grid. Last block may be
        # partial; Pallas masks the boundary, so out_shape stays (rows, 128).
        elem_bytes = jnp.dtype(slab_dtype).itemsize
        tile_bytes = tile_rows * _LANES * elem_bytes
        footprint = 4 * tile_bytes  # in + out, each double-buffered
        cp_kwargs = dict(dimension_semantics=("parallel",))
        if footprint > 12 * 1024 * 1024:
            # Caller asked for very large tiles: raise scoped VMEM explicitly.
            cp_kwargs["vmem_limit_bytes"] = min(2 * footprint, 100 * 1024 * 1024)
        y2d = pl.pallas_call(
            _fma_kernel,
            out_shape=jax.ShapeDtypeStruct((rows, _LANES), slab_dtype),
            grid=(pl.cdiv(rows, tile_rows),),
            in_specs=[
                smem_spec,
                smem_spec,
                pl.BlockSpec((tile_rows, _LANES), lambda i: (i, 0)),
            ],
            out_specs=pl.BlockSpec((tile_rows, _LANES), lambda i: (i, 0)),
            compiler_params=pltpu.CompilerParams(**cp_kwargs),
        )(w, b, x2d)

    y_flat = y2d.reshape(-1)
    if padded != total:
        # TODO(synk): ragged tail could be masked in-kernel to avoid this slice copy.
        y_flat = y_flat[:total]
    return y_flat.reshape(B, OUT).astype(x.dtype)


if __name__ == "__main__":
    key = jax.random.PRNGKey(0)
    kx, kw, kb, kx2, kx3 = jax.random.split(key, 5)

    # Same parameter shapes as nn.Linear(1, 1).
    weight = jax.random.normal(kw, (1, 1), dtype=jnp.float32)
    bias = jax.random.normal(kb, (1,), dtype=jnp.float32)

    # 1) Small-batch path (no grid; ragged batch -> single pad).
    B = 8
    x = jax.random.normal(kx, (B, 1), dtype=jnp.float32)
    out = jax.block_until_ready(simple_net_forward(x, weight, bias))
    ref = x @ weight.T + bias
    assert out.shape == (B, 1)
    assert jnp.allclose(out, ref, atol=1e-5, rtol=1e-5)

    # 2) Grid path, exact tiling (fast path: no pad, no slice copy).
    B2 = 2048  # rows = 16, tile_rows = 8 -> 2 full blocks
    x2 = jax.random.normal(kx2, (B2, 1), dtype=jnp.float32)
    out2 = jax.block_until_ready(simple_net_forward(x2, weight, bias, tile_rows=8))
    ref2 = x2 @ weight.T + bias
    assert out2.shape == (B2, 1)
    assert jnp.allclose(out2, ref2, atol=1e-5, rtol=1e-5)

    # 3) Grid path with a partial final block (ragged batch, no grid-align pad).
    B3 = 2500  # rows = 24, tile_rows = 16 -> one full block + partial 8-row block
    x3 = jax.random.normal(kx3, (B3, 1), dtype=jnp.float32)
    out3 = jax.block_until_ready(simple_net_forward(x3, weight, bias, tile_rows=16))
    ref3 = x3 @ weight.T + bias
    assert out3.shape == (B3, 1)
    assert jnp.allclose(out3, ref3, atol=1e-5, rtol=1e-5)

    print("KERNEL_OK")
</pallas_src>

<mosaic_0001>
module attributes {stable_mosaic.version = 11 : i64} {
  func.func @_fma_kernel(%arg0: memref<1xf32, #tpu.memory_space<smem>>, %arg1: memref<1xf32, #tpu.memory_space<smem>>, %arg2: memref<8x128xf32, #tpu.memory_space<vmem>>, %arg3: memref<8x128xf32, #tpu.memory_space<vmem>>) attributes {dimension_semantics = [], scalar_prefetch = 0 : i64, scratch_operands = 0 : i64, tpu.core_type = #tpu.core_type<tc>} {
    %c0 = arith.constant 0 : index
    %c0_0 = arith.constant 0 : index
    %0 = vector.load %arg2[%c0, %c0_0] : memref<8x128xf32, #tpu.memory_space<vmem>>, vector<8x128xf32>
    %c0_1 = arith.constant 0 : index
    %1 = memref.load %arg0[%c0_1] : memref<1xf32, #tpu.memory_space<smem>>
    %2 = vector.broadcast %1 : f32 to vector<8x128xf32>
    %3 = arith.mulf %0, %2 : vector<8x128xf32>
    %c0_2 = arith.constant 0 : index
    %4 = memref.load %arg1[%c0_2] : memref<1xf32, #tpu.memory_space<smem>>
    %5 = vector.broadcast %4 : f32 to vector<8x128xf32>
    %6 = arith.addf %3, %5 : vector<8x128xf32>
    %c0_3 = arith.constant 0 : index
    %c0_4 = arith.constant 0 : index
    %7 = vector.load %arg3[%c0_3, %c0_4] : memref<8x128xf32, #tpu.memory_space<vmem>>, vector<8x128xf32>
    tpu.vector_store %arg3[%c0_3, %c0_4], %6 {strides = array<i32>} : memref<8x128xf32, #tpu.memory_space<vmem>>, vector<8x128xf32>,
    return
  }
}

</mosaic_0001>

<llo_original>
// kernel: tpu_custom_call.1
$region0: #{tpu_custom_call.1}
  #allocation0 [shape = 'u32[]', space=smem, size = 0x4, offset = 0x4, fixed_abs, tag = 'smem constant byte address 0x4 - core index']
  #allocation1 [shape = 'u32[144,128]{1,0:T(1,128)}', space=vmem, size = 0x12000, scoped, tag = 'internal scratch']
  #allocation2 [shape = 'f32[1]{0:T(128)S(6)}', space=smem, size = 0x200, scoped, tag = 'scoped memory for tpu_custom_call.1']
  #allocation3 [shape = 'f32[1]{0:T(128)S(6)}', space=smem, size = 0x200, scoped, tag = 'scoped memory for tpu_custom_call.1']
  %s0 = inlined_call_operand.<no memory space> [shape: f32[1], index: 0, kind: input, shape index: {}]
  %s1 = inlined_call_operand.<no memory space> [shape: f32[1], index: 1, kind: input, shape index: {}]
  %s2 = inlined_call_operand.hbm [shape: f32[8,128], index: 2, kind: input, shape index: {}]
  %s3 = inlined_call_operand.hbm [shape: f32[8,128], index: 3, kind: output, shape index: {}]
  %s4 = sld [smem:[#allocation0]]
  $region26: #{tpu_custom_call.1} parent=0
    _
  %s6 = ssub.s32 1, %s4
  %s7 = scalar_select 0, %s6, %s4
  %8 = sst [smem:[#allocation2]] %s0
  %9 = sst [smem:[#allocation3]] %s1
  $region1: #{tpu_custom_call.1} parent=0
    #allocation4 [shape = 'u8[4096]{0}', space=vmem, size = 0x1000, scoped, tag = 'input window, operand 2, single buffered']
    #allocation5 [shape = 's32[1]{0}', space=sflag, size = 0x4, scoped, tag = 'scoped memory for tpu_custom_call.1']
    #allocation6 [shape = 's32[1]{0}', space=sflag, size = 0x4, scoped, tag = 'scoped memory for tpu_custom_call.1']
    #allocation7 [shape = 'u8[4096]{0}', space=vmem, size = 0x1000, scoped, tag = 'output window, operand 0, single buffered']
    %10 = vsyncpa [#allocation5], 0
    %11 = vsyncpa [#allocation6], 0
    // Predicated region
    $region2: #{tpu_custom_call.1} parent=1 // pred_check
      _
    $region3: #{tpu_custom_call.1} parent=1 // pred_check_branch
      %13 = sbr.rel (0) target = $region5
    $region4: #{tpu_custom_call.1} parent=1 // pred_region
      _
    $region5: #{tpu_custom_call.1} parent=1 // pred_fallthru
      _
    // Predicated region
    $region6: #{tpu_custom_call.1} parent=1 // pred_check
      _
    $region7: #{tpu_custom_call.1} parent=1 // pred_check_branch
      %15 = sbr.rel (0) target = $region9
    $region8: #{tpu_custom_call.1} parent=1 // pred_region
      _
    $region9: #{tpu_custom_call.1} parent=1 // pred_fallthru
      _
    // Predicated region
    $region10: #{tpu_custom_call.1} parent=1 // pred_check
      _
    $region11: #{tpu_custom_call.1} parent=1 // pred_check_branch
      %17 = sbr.rel (0) target = $region13
    $region12: #{tpu_custom_call.1} parent=1 // pred_region
      %s19 = ssub.s32 128, 128
      %20 = vsyncadd [#allocation5], %s19
      %s22 = sshll.u32 [#allocation4], 4
      %s23 = int_to_ptr.vmem [resolvable:$true] %s22
      %25 = dma.hbm_to_vmem [thread:$0]  %s2, 128, %s23, [#allocation5]
    $region13: #{tpu_custom_call.1} parent=1 // pred_fallthru
      _
    // Predicated region
    $region14: #{tpu_custom_call.1} parent=1 // pred_check
      _
    $region15: #{tpu_custom_call.1} parent=1 // pred_check_branch
      %27 = sbr.rel (0) target = $region17
    $region16: #{tpu_custom_call.1} parent=1 // pred_region
      %28 = dma.done [#allocation5], 128
    $region17: #{tpu_custom_call.1} parent=1 // pred_fallthru
      _
    %v29 = vld [vmem:[#allocation4] sm:$0xff]
    %s30 = sld [smem:[#allocation2]]
    %v31 = vstv %s30
    %v32 = vmul.f32 %v29, %v31
    %s33 = sld [smem:[#allocation3]]
    %v34 = vstv %s33
    %v35 = vadd.f32 %v32, %v34
    %36 = vst [vmem:[#allocation7] sm:$0xff] %v35
    // Predicated region
    $region18: #{tpu_custom_call.1} parent=1 // pred_check
      _
    $region19: #{tpu_custom_call.1} parent=1 // pred_check_branch
      %38 = sbr.rel (0) target = $region21
    $region20: #{tpu_custom_call.1} parent=1 // pred_region
      %s40 = ssub.s32 128, 128
      %41 = vsyncadd [#allocation6], %s40
      %s43 = sshll.u32 [#allocation7], 4
      %s44 = int_to_ptr.vmem [resolvable:$true] %s43
      %46 = dma.vmem_to_hbm [thread:$0]  %s44, 128, %s3, [#allocation6]
    $region21: #{tpu_custom_call.1} parent=1 // pred_fallthru
      _
    // Predicated region
    $region22: #{tpu_custom_call.1} parent=1 // pred_check
      _
    $region23: #{tpu_custom_call.1} parent=1 // pred_check_branch
      %48 = sbr.rel (0) target = $region25
    $region24: #{tpu_custom_call.1} parent=1 // pred_region
      %49 = dma.done [#allocation6], 128
    $region25: #{tpu_custom_call.1} parent=1 // pred_fallthru
      _
    %50 = vsyncpa [#allocation5], 1
    %51 = vsyncpa [#allocation6], 1

</llo_original>
